<compile_context>
chip_gen: v5e
topology: v5e:2x2
jax: 0.10.0
libtpu: 0.0.40
codegen_flags: <defaults>
</compile_context>

<pallas_src>
import functools

import jax
import jax.numpy as jnp
from jax import lax
from jax.experimental import pallas as pl
from jax.experimental.pallas import tpu as pltpu

TEMPERATURE = 0.07
BASE_TEMPERATURE = 0.07

_TM = 128      # anchor-row tile (sublane-aligned, lane-aligned for N padding)
_LANE = 128


def _round_up(x, m):
    return (x + m - 1) // m * m


def _softmax_core(sim, pos_mask, denom_mask, col_valid, loss_scale):
    """Shared per-tile SupCon math.

    sim: [TM, N_pad] f32 logits (already scaled by 1/T).
    pos_mask / denom_mask: [TM, N_pad] f32 in {0,1}.
    col_valid: [TM, N_pad] bool (real contrast columns).
    Returns the scalar sum of per-anchor losses for this row tile (padded /
    positive-free anchors contribute 0).
    """
    neg_big = jnp.float32(-1e30)
    # Row max over valid columns (the max cancels exactly in log_prob; this only
    # keeps exp() in range — matches the torch logits_max.detach() trick).
    logits_max = jnp.max(jnp.where(col_valid, sim, neg_big), axis=1, keepdims=True)
    logits = sim - logits_max
    exp_logits = jnp.exp(logits) * denom_mask
    log_denom = jnp.log(jnp.sum(exp_logits, axis=1, keepdims=True))
    log_prob = logits - log_denom

    pos_sum = jnp.sum(pos_mask * log_prob, axis=1, keepdims=True)
    pos_cnt = jnp.sum(pos_mask, axis=1, keepdims=True)
    # Guard anchors with zero positives (padded rows / singleton classes).
    mean_log_prob_pos = jnp.where(pos_cnt > 0.0,
                                  pos_sum / jnp.maximum(pos_cnt, 1.0),
                                  jnp.float32(0.0))
    return jnp.sum(loss_scale * mean_log_prob_pos)


def _supcon_labels_kernel(n_valid, inv_temp, loss_scale,
                          lab_row_ref, lab_col_ref, frow_ref, fall_ref, out_ref):
    # lab_row_ref: [TM, 1] int32 labels of this row tile (view-major)
    # lab_col_ref: [1, N_pad] int32 labels of all contrast columns
    # frow_ref:    [TM, D_pad] bf16 anchor rows
    # fall_ref:    [N_pad, D_pad] bf16 all contrast features (resident)
    # out_ref:     [1, 8, 128] f32 lane-padded partial loss for this tile
    tm = frow_ref.shape[0]
    n_pad = fall_ref.shape[0]

    # Gram tile on the MXU: bf16 operands, f32 accumulate; contracting dim 1 of
    # both operands folds the transpose into the MXU feed (no materialized F^T).
    sim = lax.dot_general(
        frow_ref[...], fall_ref[...],
        dimension_numbers=(((1,), (1,)), ((), ())),
        preferred_element_type=jnp.float32) * inv_temp

    row_ids = pl.program_id(0) * tm + lax.broadcasted_iota(jnp.int32, (tm, n_pad), 0)
    col_ids = lax.broadcasted_iota(jnp.int32, (tm, n_pad), 1)
    not_self = row_ids != col_ids
    col_valid = col_ids < n_valid
    row_valid = row_ids < n_valid

    lab_eq = lab_row_ref[...] == lab_col_ref[...]                     # [TM, N_pad]
    pos_mask = (lab_eq & not_self & col_valid & row_valid).astype(jnp.float32)
    denom_mask = (not_self & col_valid).astype(jnp.float32)

    partial = _softmax_core(sim, pos_mask, denom_mask, col_valid, loss_scale)
    out_ref[...] = jnp.broadcast_to(partial, (1, 8, _LANE))


def _supcon_mask_kernel(n_valid, inv_temp, loss_scale,
                        pmask_ref, frow_ref, fall_ref, out_ref):
    # pmask_ref: [TM, N_pad] bf16 tiled positive mask (padded rows/cols are 0;
    #            diagonal exclusion handled in-kernel)
    tm = frow_ref.shape[0]
    n_pad = fall_ref.shape[0]

    sim = lax.dot_general(
        frow_ref[...], fall_ref[...],
        dimension_numbers=(((1,), (1,)), ((), ())),
        preferred_element_type=jnp.float32) * inv_temp

    row_ids = pl.program_id(0) * tm + lax.broadcasted_iota(jnp.int32, (tm, n_pad), 0)
    col_ids = lax.broadcasted_iota(jnp.int32, (tm, n_pad), 1)
    not_self = row_ids != col_ids
    col_valid = col_ids < n_valid

    pos_mask = pmask_ref[...].astype(jnp.float32) * not_self.astype(jnp.float32)
    denom_mask = (not_self & col_valid).astype(jnp.float32)

    partial = _softmax_core(sim, pos_mask, denom_mask, col_valid, loss_scale)
    out_ref[...] = jnp.broadcast_to(partial, (1, 8, _LANE))


def supcon_loss(features, labels=None, mask=None,
                temperature=TEMPERATURE, base_temperature=BASE_TEMPERATURE,
                contrast_mode='all'):
    """features: [bsz, n_views, ...]; labels: [bsz] int or None; mask: [bsz, bsz] or None."""
    if features.ndim < 3:
        raise ValueError('`features` needs to be [bsz, n_views, ...]')
    if features.ndim > 3:
        features = features.reshape(features.shape[0], features.shape[1], -1)
    if contrast_mode != 'all':
        # TODO(synk): contrast_mode='one' (anchor = view 0 only) not implemented.
        raise NotImplementedError("only contrast_mode='all' is implemented")
    if labels is not None and mask is not None:
        raise ValueError('Cannot define both `labels` and `mask`')

    bsz, n_views, d = features.shape
    n = bsz * n_views
    n_pad = _round_up(max(n, _TM), _TM)       # multiple of TM (=128, lane-aligned)
    d_pad = _round_up(d, _LANE)               # MXU contraction dim -> multiple of 128
    num_tiles = n_pad // _TM

    inv_temp = 1.0 / float(temperature)
    loss_scale = -(float(temperature) / float(base_temperature))

    # contrast_feature = cat(unbind(features, dim=1), dim=0)  -> view-major [n, d]
    cf = jnp.transpose(features, (1, 0, 2)).reshape(n, d)
    cf = jnp.pad(cf.astype(jnp.float32), ((0, n_pad - n), (0, d_pad - d)))
    cf = cf.astype(jnp.bfloat16)              # MXU operands in bf16; accum stays f32

    out_shape = jax.ShapeDtypeStruct((num_tiles, 8, _LANE), jnp.float32)
    frow_spec = pl.BlockSpec((_TM, d_pad), lambda i: (i, 0))
    fall_spec = pl.BlockSpec((n_pad, d_pad), lambda i: (0, 0))   # constant -> fetched once
    out_spec = pl.BlockSpec((1, 8, _LANE), lambda i: (i, 0, 0))
    cparams = pltpu.CompilerParams(
        dimension_semantics=("parallel",),    # shard anchor tiles across TCs (v7x)
        vmem_limit_bytes=48 * 1024 * 1024,    # fits v7x's 64 MiB with headroom
    )

    if mask is None:
        if labels is None:
            # SimCLR: eye(bsz) positives == each sample is its own class.
            lab = jnp.arange(bsz, dtype=jnp.int32)
        else:
            lab = labels.reshape(-1).astype(jnp.int32)
            if lab.shape[0] != bsz:
                raise ValueError('Num of labels does not match num of features')
        lab_n = jnp.tile(lab, (n_views,))                             # view-major
        lab_n = jnp.pad(lab_n, (0, n_pad - n), constant_values=-1)
        lab_row = lab_n.reshape(n_pad, 1)
        lab_col = lab_n.reshape(1, n_pad)

        partials = pl.pallas_call(
            functools.partial(_supcon_labels_kernel, n, inv_temp, loss_scale),
            out_shape=out_shape,
            grid_spec=pltpu.PrefetchScalarGridSpec(
                num_scalar_prefetch=0,
                grid=(num_tiles,),
                in_specs=[
                    pl.BlockSpec((_TM, 1), lambda i: (i, 0)),     # row labels
                    pl.BlockSpec((1, n_pad), lambda i: (0, 0)),   # col labels
                    frow_spec,
                    fall_spec,
                ],
                out_specs=out_spec,
            ),
            compiler_params=cparams,
        )(lab_row, lab_col, cf, cf)
    else:
        # Arbitrary user mask: keep it as a (bf16) kernel input, tiled on host.
        base = mask.astype(jnp.float32)
        full = jnp.tile(base, (n_views, n_views))                     # [n, n]
        full = jnp.pad(full, ((0, n_pad - n), (0, n_pad - n))).astype(jnp.bfloat16)

        partials = pl.pallas_call(
            functools.partial(_supcon_mask_kernel, n, inv_temp, loss_scale),
            out_shape=out_shape,
            grid_spec=pltpu.PrefetchScalarGridSpec(
                num_scalar_prefetch=0,
                grid=(num_tiles,),
                in_specs=[
                    pl.BlockSpec((_TM, n_pad), lambda i: (i, 0)),  # positive-mask rows
                    frow_spec,
                    fall_spec,
                ],
                out_specs=out_spec,
            ),
            compiler_params=cparams,
        )(full, cf, cf)

    # loss.view(anchor_count, batch_size).mean() == mean over all N anchors.
    return jnp.sum(partials[:, 0, 0]) / n


# ---------------------------------------------------------------------------
# Pure-JAX reference (same bf16 MXU operands / f32 accumulation as the kernel).
def _ref_supcon(features, labels=None, mask=None):
    b, v, d = features.shape
    n = b * v
    cf = jnp.transpose(features, (1, 0, 2)).reshape(n, d)
    if mask is None:
        if labels is None:
            base = jnp.eye(b, dtype=jnp.float32)
        else:
            l = labels.reshape(-1, 1)
            base = (l == l.T).astype(jnp.float32)
    else:
        base = mask.astype(jnp.float32)
    cfb = cf.astype(jnp.bfloat16)
    sim = jnp.dot(cfb, cfb.T, preferred_element_type=jnp.float32) * (1.0 / TEMPERATURE)
    sim = sim - jnp.max(sim, axis=1, keepdims=True)
    lm = 1.0 - jnp.eye(n)
    m = jnp.tile(base, (v, v)) * lm
    exp_l = jnp.exp(sim) * lm
    lp = sim - jnp.log(exp_l.sum(1, keepdims=True))
    mlp = (m * lp).sum(1) / m.sum(1)
    return jnp.mean(-(TEMPERATURE / BASE_TEMPERATURE) * mlp)


if __name__ == "__main__":
    key = jax.random.PRNGKey(0)
    bsz, n_views, feat_dim = 8, 2, 32
    kf, kl = jax.random.split(key)
    feats = jax.random.normal(kf, (bsz, n_views, feat_dim), dtype=jnp.float32)
    # L2-normalize (typical SupConLoss usage; module itself does not require it)
    feats = feats / jnp.linalg.norm(feats, axis=-1, keepdims=True)
    labels = jax.random.randint(kl, (bsz,), 0, 4)

    # Labels path
    loss_lab = supcon_loss(feats, labels=labels)
    jax.block_until_ready(loss_lab)
    ref_lab = _ref_supcon(feats, labels=labels)
    assert jnp.allclose(loss_lab, ref_lab, rtol=1e-4, atol=1e-4), (loss_lab, ref_lab)

    # Explicit-mask path (same positives -> same loss)
    base_mask = (labels.reshape(-1, 1) == labels.reshape(1, -1)).astype(jnp.float32)
    loss_msk = supcon_loss(feats, mask=base_mask)
    jax.block_until_ready(loss_msk)
    assert jnp.allclose(loss_msk, ref_lab, rtol=1e-4, atol=1e-4), (loss_msk, ref_lab)

    # SimCLR (unsupervised) path
    loss_simclr = supcon_loss(feats)
    jax.block_until_ready(loss_simclr)
    ref_simclr = _ref_supcon(feats)
    assert jnp.allclose(loss_simclr, ref_simclr, rtol=1e-4, atol=1e-4), (loss_simclr, ref_simclr)

    print("KERNEL_OK")
</pallas_src>

<mosaic_0001>
module attributes {stable_mosaic.version = 11 : i64} {
  func.func @_supcon_labels_kernel(%arg0: i32, %arg1: memref<128x1xi32, #tpu.memory_space<vmem>>, %arg2: memref<1x128xi32, #tpu.memory_space<vmem>>, %arg3: memref<128x128xbf16, #tpu.memory_space<vmem>>, %arg4: memref<128x128xbf16, #tpu.memory_space<vmem>>, %arg5: memref<1x8x128xf32, #tpu.memory_space<vmem>>) attributes {dimension_semantics = [#tpu.dimension_semantics<parallel>], iteration_bounds = array<i64: 1>, scalar_prefetch = 0 : i64, scratch_operands = 0 : i64, tpu.core_type = #tpu.core_type<tc>, window_params = [{transform_indices = @transform_0, window_bounds = array<i64: 128, 1>}, {pipeline_mode = #tpu.pipeline_mode<synchronous>, transform_indices = @transform_1, window_bounds = array<i64: 1, 128>}, {transform_indices = @transform_2, window_bounds = array<i64: 128, 128>}, {pipeline_mode = #tpu.pipeline_mode<synchronous>, transform_indices = @transform_3, window_bounds = array<i64: 128, 128>}, {transform_indices = @transform_4, window_bounds = array<i64: 1, 8, 128>}]} {
    %c0 = arith.constant 0 : index
    %c0_0 = arith.constant 0 : index
    %0 = vector.load %arg3[%c0, %c0_0] : memref<128x128xbf16, #tpu.memory_space<vmem>>, vector<128x128xbf16>
    %c0_1 = arith.constant 0 : index
    %c0_2 = arith.constant 0 : index
    %1 = vector.load %arg4[%c0_1, %c0_2] : memref<128x128xbf16, #tpu.memory_space<vmem>>, vector<128x128xbf16>
    %cst = arith.constant dense<0.000000e+00> : vector<128x128xf32>
    %2 = tpu.matmul %0, %1, %cst {dimension_numbers = #tpu.dot_dimension_numbers<[1], [1], [0], [0], [0, 0, 1, 0], [], []>} : vector<128x128xbf16>, vector<128x128xbf16>, vector<128x128xf32> -> vector<128x128xf32>
    %cst_3 = arith.constant 14.2857141 : f32
    %3 = vector.broadcast %cst_3 : f32 to vector<128x128xf32>
    %4 = arith.mulf %2, %3 : vector<128x128xf32>
    %c128_i32 = arith.constant 128 : i32
    %5 = arith.muli %arg0, %c128_i32 : i32
    %6 = tpu.iota {dimensions = array<i32: 0>} : vector<128x128xi32>
    %7 = vector.broadcast %5 : i32 to vector<128x128xi32>
    %8 = arith.addi %7, %6 : vector<128x128xi32>
    %9 = tpu.iota {dimensions = array<i32: 1>} : vector<128x128xi32>
    %10 = arith.cmpi ne, %8, %9 : vector<128x128xi32>
    %c16_i32 = arith.constant 16 : i32
    %11 = vector.broadcast %c16_i32 : i32 to vector<128x128xi32>
    %12 = arith.cmpi slt, %9, %11 : vector<128x128xi32>
    %c16_i32_4 = arith.constant 16 : i32
    %13 = vector.broadcast %c16_i32_4 : i32 to vector<128x128xi32>
    %14 = arith.cmpi slt, %8, %13 : vector<128x128xi32>
    %c0_5 = arith.constant 0 : index
    %c0_6 = arith.constant 0 : index
    %15 = vector.load %arg1[%c0_5, %c0_6] : memref<128x1xi32, #tpu.memory_space<vmem>>, vector<128x1xi32>
    %c0_7 = arith.constant 0 : index
    %c0_8 = arith.constant 0 : index
    %16 = vector.load %arg2[%c0_7, %c0_8] : memref<1x128xi32, #tpu.memory_space<vmem>>, vector<1x128xi32>
    %17 = vector.broadcast %15 : vector<128x1xi32> to vector<128x128xi32>
    %18 = vector.broadcast %16 : vector<1x128xi32> to vector<128x128xi32>
    %19 = arith.cmpi eq, %17, %18 : vector<128x128xi32>
    %20 = arith.andi %19, %10 : vector<128x128xi1>
    %21 = arith.andi %20, %12 : vector<128x128xi1>
    %22 = arith.andi %21, %14 : vector<128x128xi1>
    %23 = arith.extui %22 : vector<128x128xi1> to vector<128x128xi32>
    %24 = arith.sitofp %23 : vector<128x128xi32> to vector<128x128xf32>
    %25 = arith.andi %10, %12 : vector<128x128xi1>
    %26 = arith.extui %25 : vector<128x128xi1> to vector<128x128xi32>
    %27 = arith.sitofp %26 : vector<128x128xi32> to vector<128x128xf32>
    %cst_9 = arith.constant -1.000000e+30 : f32
    %28 = vector.broadcast %cst_9 : f32 to vector<128x128xf32>
    %29 = arith.select %12, %4, %28 : vector<128x128xi1>, vector<128x128xf32>
    %cst_10 = arith.constant dense<0xFF800000> : vector<128xf32>
    %30 = vector.multi_reduction <maximumf>, %29, %cst_10 [1] : vector<128x128xf32> to vector<128xf32>
    %31 = vector.shape_cast %30 : vector<128xf32> to vector<128x1xf32>
    %32 = vector.broadcast %31 : vector<128x1xf32> to vector<128x128xf32>
    %33 = arith.subf %4, %32 : vector<128x128xf32>
    %34 = math.exp %33 : vector<128x128xf32>
    %35 = arith.mulf %34, %27 : vector<128x128xf32>
    %cst_11 = arith.constant dense<0.000000e+00> : vector<128xf32>
    %36 = vector.multi_reduction <add>, %35, %cst_11 [1] : vector<128x128xf32> to vector<128xf32>
    %37 = vector.shape_cast %36 : vector<128xf32> to vector<128x1xf32>
    %38 = math.log %37 : vector<128x1xf32>
    %39 = vector.broadcast %38 : vector<128x1xf32> to vector<128x128xf32>
    %40 = arith.subf %33, %39 : vector<128x128xf32>
    %41 = arith.mulf %24, %40 : vector<128x128xf32>
    %cst_12 = arith.constant dense<0.000000e+00> : vector<128xf32>
    %42 = vector.multi_reduction <add>, %41, %cst_12 [1] : vector<128x128xf32> to vector<128xf32>
    %43 = vector.shape_cast %42 : vector<128xf32> to vector<128x1xf32>
    %cst_13 = arith.constant dense<0.000000e+00> : vector<128xf32>
    %44 = vector.multi_reduction <add>, %24, %cst_13 [1] : vector<128x128xf32> to vector<128xf32>
    %45 = vector.shape_cast %44 : vector<128xf32> to vector<128x1xf32>
    %cst_14 = arith.constant 0.000000e+00 : f32
    %46 = vector.broadcast %cst_14 : f32 to vector<128x1xf32>
    %47 = arith.cmpf ogt, %45, %46 : vector<128x1xf32>
    %cst_15 = arith.constant 1.000000e+00 : f32
    %48 = vector.broadcast %cst_15 : f32 to vector<128x1xf32>
    %49 = arith.maximumf %45, %48 : vector<128x1xf32>
    %50 = arith.divf %43, %49 : vector<128x1xf32>
    %cst_16 = arith.constant 0.000000e+00 : f32
    %51 = vector.broadcast %cst_16 : f32 to vector<128x1xf32>
    %52 = arith.select %47, %50, %51 : vector<128x1xi1>, vector<128x1xf32>
    %cst_17 = arith.constant -1.000000e+00 : f32
    %53 = vector.broadcast %cst_17 : f32 to vector<128x1xf32>
    %54 = arith.mulf %53, %52 : vector<128x1xf32>
    %55 = vector.shape_cast %54 : vector<128x1xf32> to vector<1x128x1xf32>
    %cst_18 = arith.constant dense<0.000000e+00> : vector<1xf32>
    %56 = vector.multi_reduction <add>, %55, %cst_18 [1, 2] : vector<1x128x1xf32> to vector<1xf32>
    %57 = vector.shape_cast %56 : vector<1xf32> to vector<1x1x1xf32>
    %58 = vector.extract %57[0, 0, 0] : f32 from vector<1x1x1xf32>
    %59 = vector.broadcast %58 : f32 to vector<1x8x128xf32>
    %c0_19 = arith.constant 0 : index
    %c0_20 = arith.constant 0 : index
    %c0_21 = arith.constant 0 : index
    %60 = vector.load %arg5[%c0_19, %c0_20, %c0_21] : memref<1x8x128xf32, #tpu.memory_space<vmem>>, vector<1x8x128xf32>
    tpu.vector_store %arg5[%c0_19, %c0_20, %c0_21], %59 {strides = array<i32>} : memref<1x8x128xf32, #tpu.memory_space<vmem>>, vector<1x8x128xf32>,
    return
  }
  func.func @transform_0(%arg0: i32) -> (i32, i32) {
    %c0_i32 = arith.constant 0 : i32
    %c0_i32_0 = arith.constant 0 : i32
    return %arg0, %c0_i32 : i32, i32
  }
  func.func @transform_1(%arg0: i32) -> (i32, i32) {
    %c0_i32 = arith.constant 0 : i32
    %c0_i32_0 = arith.constant 0 : i32
    %c0_i32_1 = arith.constant 0 : i32
    return %c0_i32, %c0_i32_0 : i32, i32
  }
  func.func @transform_2(%arg0: i32) -> (i32, i32) {
    %c0_i32 = arith.constant 0 : i32
    %c0_i32_0 = arith.constant 0 : i32
    return %arg0, %c0_i32 : i32, i32
  }
  func.func @transform_3(%arg0: i32) -> (i32, i32) {
    %c0_i32 = arith.constant 0 : i32
    %c0_i32_0 = arith.constant 0 : i32
    %c0_i32_1 = arith.constant 0 : i32
    return %c0_i32, %c0_i32_0 : i32, i32
  }
  func.func @transform_4(%arg0: i32) -> (i32, i32, i32) {
    %c0_i32 = arith.constant 0 : i32
    %c0_i32_0 = arith.constant 0 : i32
    %c0_i32_1 = arith.constant 0 : i32
    return %arg0, %c0_i32, %c0_i32_0 : i32, i32, i32
  }
}

</mosaic_0001>

<llo_original>
// kernel: tpu_custom_call.1
$region0: #{tpu_custom_call.1}
  #allocation0 [shape = 'u32[]', space=smem, size = 0x4, offset = 0x4, fixed_abs, tag = 'smem constant byte address 0x4 - core index']
  #allocation1 [shape = 'u32[72,128]{1,0:T(1,128)}', space=vmem, size = 0x9000, scoped, tag = 'internal scratch']
  %s0 = inlined_call_operand.vmem [shape: s32[128,1], index: 0, kind: input, shape index: {}]
  %s1 = inlined_call_operand.vmem [shape: s32[1,128], index: 1, kind: input, shape index: {}]
  %s2 = inlined_call_operand.vmem [shape: bf16[128,128], index: 2, kind: input, shape index: {}]
  %s3 = inlined_call_operand.vmem [shape: bf16[128,128], index: 3, kind: input, shape index: {}]
  %s4 = inlined_call_operand.hbm [shape: f32[1,8,128], index: 4, kind: output, shape index: {}]
  %s5 = sld [smem:[#allocation0]]
  $region26: #{tpu_custom_call.1} parent=0
    _
  %s7 = ssub.s32 1, %s5
  %s8 = scalar_select 0, %s7, %s5
  $region1: #{tpu_custom_call.1} parent=0
    #allocation2 [shape = 'u8[4096]{0}', space=vmem, size = 0x1000, scoped, tag = 'output window, operand 0, single buffered']
    #allocation3 [shape = 's32[1]{0}', space=sflag, size = 0x4, scoped, tag = 'scoped memory for tpu_custom_call.1']
    %9 = vsyncpa [#allocation3], 0
    // Predicated region
    $region2: #{tpu_custom_call.1} parent=1 // pred_check
      _
    $region3: #{tpu_custom_call.1} parent=1 // pred_check_branch
      %11 = sbr.rel (0) target = $region5
    $region4: #{tpu_custom_call.1} parent=1 // pred_region
      _
    $region5: #{tpu_custom_call.1} parent=1 // pred_fallthru
      _
    // Predicated region
    $region6: #{tpu_custom_call.1} parent=1 // pred_check
      _
    $region7: #{tpu_custom_call.1} parent=1 // pred_check_branch
      %13 = sbr.rel (0) target = $region9
    $region8: #{tpu_custom_call.1} parent=1 // pred_region
      _
    $region9: #{tpu_custom_call.1} parent=1 // pred_fallthru
      _
    // Predicated region
    $region10: #{tpu_custom_call.1} parent=1 // pred_check
      _
    $region11: #{tpu_custom_call.1} parent=1 // pred_check_branch
      %15 = sbr.rel (0) target = $region13
    $region12: #{tpu_custom_call.1} parent=1 // pred_region
      _
    $region13: #{tpu_custom_call.1} parent=1 // pred_fallthru
      _
    // Predicated region
    $region14: #{tpu_custom_call.1} parent=1 // pred_check
      _
    $region15: #{tpu_custom_call.1} parent=1 // pred_check_branch
      %17 = sbr.rel (0) target = $region17
    $region16: #{tpu_custom_call.1} parent=1 // pred_region
      _
    $region17: #{tpu_custom_call.1} parent=1 // pred_fallthru
      _
    %v18 = vld [vmem:[%s2] sm:$0xf]
    %v19 = vld [vmem:[%s2 + $0x4] sm:$0xf]
    %v20 = vld [vmem:[%s2 + $0x8] sm:$0xf]
    %v21 = vld [vmem:[%s2 + $0xc] sm:$0xf]
    %v22 = vld [vmem:[%s2 + $0x10] sm:$0xf]
    %v23 = vld [vmem:[%s2 + $0x14] sm:$0xf]
    %v24 = vld [vmem:[%s2 + $0x18] sm:$0xf]
    %v25 = vld [vmem:[%s2 + $0x1c] sm:$0xf]
    %v26 = vld [vmem:[%s2 + $0x20] sm:$0xf]
    %v27 = vld [vmem:[%s2 + $0x24] sm:$0xf]
    %v28 = vld [vmem:[%s2 + $0x28] sm:$0xf]
    %v29 = vld [vmem:[%s2 + $0x2c] sm:$0xf]
    %v30 = vld [vmem:[%s2 + $0x30] sm:$0xf]
    %v31 = vld [vmem:[%s2 + $0x34] sm:$0xf]
    %v32 = vld [vmem:[%s2 + $0x38] sm:$0xf]
    %v33 = vld [vmem:[%s2 + $0x3c] sm:$0xf]
    %v34 = vld [vmem:[%s3] sm:$0xf]
    %v35 = vld [vmem:[%s3 + $0x4] sm:$0xf]
    %v36 = vld [vmem:[%s3 + $0x8] sm:$0xf]
    %v37 = vld [vmem:[%s3 + $0xc] sm:$0xf]
    %v38 = vld [vmem:[%s3 + $0x10] sm:$0xf]
    %v39 = vld [vmem:[%s3 + $0x14] sm:$0xf]
    %v40 = vld [vmem:[%s3 + $0x18] sm:$0xf]
    %v41 = vld [vmem:[%s3 + $0x1c] sm:$0xf]
    %v42 = vld [vmem:[%s3 + $0x20] sm:$0xf]
    %v43 = vld [vmem:[%s3 + $0x24] sm:$0xf]
    %v44 = vld [vmem:[%s3 + $0x28] sm:$0xf]
    %v45 = vld [vmem:[%s3 + $0x2c] sm:$0xf]
    %v46 = vld [vmem:[%s3 + $0x30] sm:$0xf]
    %v47 = vld [vmem:[%s3 + $0x34] sm:$0xf]
    %v48 = vld [vmem:[%s3 + $0x38] sm:$0xf]
    %v49 = vld [vmem:[%s3 + $0x3c] sm:$0xf]
    %v66 = vunpack.c.l.b16 %v18
    %v67 = vunpack.c.l.b16 %v19
    %v68 = vunpack.c.l.b16 %v20
    %v69 = vunpack.c.l.b16 %v21
    %v70 = vunpack.c.l.b16 %v22
    %v71 = vunpack.c.l.b16 %v23
    %v72 = vunpack.c.l.b16 %v24
    %v73 = vunpack.c.l.b16 %v25
    %v74 = vunpack.c.l.b16 %v26
    %v75 = vunpack.c.l.b16 %v27
    %v76 = vunpack.c.l.b16 %v28
    %v77 = vunpack.c.l.b16 %v29
    %v78 = vunpack.c.l.b16 %v30
    %v79 = vunpack.c.l.b16 %v31
    %v80 = vunpack.c.l.b16 %v32
    %v81 = vunpack.c.l.b16 %v33
    %v82 = vpack.c.b16 %v67, %v66
    %v83 = vpack.c.b16 %v69, %v68
    %v84 = vpack.c.b16 %v71, %v70
    %v85 = vpack.c.b16 %v73, %v72
    %v86 = vpack.c.b16 %v75, %v74
    %v87 = vpack.c.b16 %v77, %v76
    %v88 = vpack.c.b16 %v79, %v78
    %v89 = vpack.c.b16 %v81, %v80
    %v114 = vunpack.c.l.b16 %v34
    %v115 = vunpack.c.l.b16 %v35
    %v116 = vunpack.c.l.b16 %v36
    %v117 = vunpack.c.l.b16 %v37
    %v118 = vunpack.c.l.b16 %v38
    %v119 = vunpack.c.l.b16 %v39
    %v120 = vunpack.c.l.b16 %v40
    %v121 = vunpack.c.l.b16 %v41
    %v122 = vunpack.c.l.b16 %v42
    %v123 = vunpack.c.l.b16 %v43
    %v124 = vunpack.c.l.b16 %v44
    %v125 = vunpack.c.l.b16 %v45
    %v126 = vunpack.c.l.b16 %v46
    %v127 = vunpack.c.l.b16 %v47
    %v128 = vunpack.c.l.b16 %v48
    %v129 = vunpack.c.l.b16 %v49
    %v130 = vpack.c.b16 %v115, %v114
    %v131 = vpack.c.b16 %v117, %v116
    %v132 = vpack.c.b16 %v119, %v118
    %v133 = vpack.c.b16 %v121, %v120
    %v134 = vpack.c.b16 %v123, %v122
    %v135 = vpack.c.b16 %v125, %v124
    %v136 = vpack.c.b16 %v127, %v126
    %v137 = vpack.c.b16 %v129, %v128
    %146 = vmatpush.bf16.xpose.msra.mxu0 %v137
    %147 = vmatpush.bf16.xpose.msra.mxu0 %v136
    %148 = vmatpush.bf16.xpose.msra.mxu0 %v135
    %149 = vmatpush.bf16.xpose.msra.mxu0 %v134
    %150 = vmatpush.bf16.xpose.msra.mxu0 %v133
    %151 = vmatpush.bf16.xpose.msra.mxu0 %v132
    %152 = vmatpush.bf16.xpose.msra.mxu0 %v131
    %153 = vmatpush.bf16.xpose.msra.mxu0 %v130
    %154 = vmatmul.bf16.gmra.mxu0 %v82
    %v155 = vpop.f32.mrf.mxu0
    %v156 = vadd.f32 0.0, %v155
    %v157 = vpop.f32.mrf.mxu0
    %v158 = vadd.f32 0.0, %v157
    %159 = vmatmul.bf16.gmra.mxu0 %v83
    %v160 = vpop.f32.mrf.mxu0
    %v161 = vadd.f32 0.0, %v160
    %v162 = vpop.f32.mrf.mxu0
    %v163 = vadd.f32 0.0, %v162
    %164 = vmatmul.bf16.gmra.mxu0 %v84
    %v165 = vpop.f32.mrf.mxu0
    %v166 = vadd.f32 0.0, %v165
    %v167 = vpop.f32.mrf.mxu0
    %v168 = vadd.f32 0.0, %v167
    %169 = vmatmul.bf16.gmra.mxu0 %v85
    %v170 = vpop.f32.mrf.mxu0
    %v171 = vadd.f32 0.0, %v170
    %v172 = vpop.f32.mrf.mxu0
    %v173 = vadd.f32 0.0, %v172
    %174 = vmatmul.bf16.gmra.mxu0 %v86
    %v175 = vpop.f32.mrf.mxu0
    %v176 = vadd.f32 0.0, %v175
    %v177 = vpop.f32.mrf.mxu0
    %v178 = vadd.f32 0.0, %v177
    %179 = vmatmul.bf16.gmra.mxu0 %v87
    %v180 = vpop.f32.mrf.mxu0
    %v181 = vadd.f32 0.0, %v180
    %v182 = vpop.f32.mrf.mxu0
    %v183 = vadd.f32 0.0, %v182
    %184 = vmatmul.bf16.gmra.mxu0 %v88
    %v185 = vpop.f32.mrf.mxu0
    %v186 = vadd.f32 0.0, %v185
    %v187 = vpop.f32.mrf.mxu0
    %v188 = vadd.f32 0.0, %v187
    %189 = vmatmul.bf16.gmra.mxu0 %v89
    %v190 = vpop.f32.mrf.mxu0
    %v191 = vadd.f32 0.0, %v190
    %v192 = vpop.f32.mrf.mxu0
    %v193 = vadd.f32 0.0, %v192
    %194 = vdwg.mxu0
    %v195 = vmul.f32 %v156, 14.285714
    %v196 = vmul.f32 %v158, 14.285714
    %v197 = vmul.f32 %v161, 14.285714
    %v198 = vmul.f32 %v163, 14.285714
    %v199 = vmul.f32 %v166, 14.285714
    %v200 = vmul.f32 %v168, 14.285714
    %v201 = vmul.f32 %v171, 14.285714
    %v202 = vmul.f32 %v173, 14.285714
    %v203 = vmul.f32 %v176, 14.285714
    %v204 = vmul.f32 %v178, 14.285714
    %v205 = vmul.f32 %v181, 14.285714
    %v206 = vmul.f32 %v183, 14.285714
    %v207 = vmul.f32 %v186, 14.285714
    %v208 = vmul.f32 %v188, 14.285714
    %v209 = vmul.f32 %v191, 14.285714
    %v210 = vmul.f32 %v193, 14.285714
    %s211 = smul.u32 0, 128
    %v212 = vlaneseq
    %v213 = vshrl.u32 %v212, 7
    %v214 = vadd.s32 %v213, 8
    %v215 = vadd.s32 %v213, 16
    %v216 = vadd.s32 %v213, 24
    %v217 = vadd.s32 %v213, 32
    %v218 = vadd.s32 %v213, 40
    %v219 = vadd.s32 %v213, 48
    %v220 = vadd.s32 %v213, 56
    %v221 = vadd.s32 %v213, 64
    %v222 = vadd.s32 %v213, 72
    %v223 = vadd.s32 %v213, 80
    %v224 = vadd.s32 %v213, 88
    %v225 = vadd.s32 %v213, 96
    %v226 = vadd.s32 %v213, 104
    %v227 = vadd.s32 %v213, 112
    %v228 = vadd.s32 %v213, 120
    %v229 = vstv %s211
    %v230 = vadd.s32 %v229, %v213
    %v231 = vadd.s32 %v229, %v214
    %v232 = vadd.s32 %v229, %v215
    %v233 = vadd.s32 %v229, %v216
    %v234 = vadd.s32 %v229, %v217
    %v235 = vadd.s32 %v229, %v218
    %v236 = vadd.s32 %v229, %v219
    %v237 = vadd.s32 %v229, %v220
    %v238 = vadd.s32 %v229, %v221
    %v239 = vadd.s32 %v229, %v222
    %v240 = vadd.s32 %v229, %v223
    %v241 = vadd.s32 %v229, %v224
    %v242 = vadd.s32 %v229, %v225
    %v243 = vadd.s32 %v229, %v226
    %v244 = vadd.s32 %v229, %v227
    %v245 = vadd.s32 %v229, %v228
    %v246 = vlaneseq
    %v247 = vand.u32 %v246, 127
    %vm248 = vcmp.ne.s32.totalorder %v230, %v247
    %vm249 = vcmp.ne.s32.totalorder %v231, %v247
    %vm250 = vcmp.ne.s32.totalorder %v232, %v247
    %vm251 = vcmp.ne.s32.totalorder %v233, %v247
    %vm252 = vcmp.ne.s32.totalorder %v234, %v247
    %vm253 = vcmp.ne.s32.totalorder %v235, %v247
    %vm254 = vcmp.ne.s32.totalorder %v236, %v247
    %vm255 = vcmp.ne.s32.totalorder %v237, %v247
    %vm256 = vcmp.ne.s32.totalorder %v238, %v247
    %vm257 = vcmp.ne.s32.totalorder %v239, %v247
    %vm258 = vcmp.ne.s32.totalorder %v240, %v247
    %vm259 = vcmp.ne.s32.totalorder %v241, %v247
    %vm260 = vcmp.ne.s32.totalorder %v242, %v247
    %vm261 = vcmp.ne.s32.totalorder %v243, %v247
    %vm262 = vcmp.ne.s32.totalorder %v244, %v247
    %vm263 = vcmp.ne.s32.totalorder %v245, %v247
    %vm264 = vcmp.lt.s32.totalorder %v247, 16
    %vm265 = vcmp.lt.s32.totalorder %v230, 16
    %vm266 = vcmp.lt.s32.totalorder %v231, 16
    %vm267 = vcmp.lt.s32.totalorder %v232, 16
    %vm268 = vcmp.lt.s32.totalorder %v233, 16
    %vm269 = vcmp.lt.s32.totalorder %v234, 16
    %vm270 = vcmp.lt.s32.totalorder %v235, 16
    %vm271 = vcmp.lt.s32.totalorder %v236, 16
    %vm272 = vcmp.lt.s32.totalorder %v237, 16
    %vm273 = vcmp.lt.s32.totalorder %v238, 16
    %vm274 = vcmp.lt.s32.totalorder %v239, 16
    %vm275 = vcmp.lt.s32.totalorder %v240, 16
    %vm276 = vcmp.lt.s32.totalorder %v241, 16
    %vm277 = vcmp.lt.s32.totalorder %v242, 16
    %vm278 = vcmp.lt.s32.totalorder %v243, 16
    %vm279 = vcmp.lt.s32.totalorder %v244, 16
    %vm280 = vcmp.lt.s32.totalorder %v245, 16
    %v281 = vld [vmem:[%s0] sm:$0xff]
    %v282 = vld [vmem:[%s0 + $0x8] sm:$0xff]
    %v283 = vld [vmem:[%s0 + $0x10] sm:$0xff]
    %v284 = vld [vmem:[%s0 + $0x18] sm:$0xff]
    %v285 = vld [vmem:[%s0 + $0x20] sm:$0xff]
    %v286 = vld [vmem:[%s0 + $0x28] sm:$0xff]
    %v287 = vld [vmem:[%s0 + $0x30] sm:$0xff]
    %v288 = vld [vmem:[%s0 + $0x38] sm:$0xff]
    %v289 = vld [vmem:[%s0 + $0x40] sm:$0xff]
    %v290 = vld [vmem:[%s0 + $0x48] sm:$0xff]
    %v291 = vld [vmem:[%s0 + $0x50] sm:$0xff]
    %v292 = vld [vmem:[%s0 + $0x58] sm:$0xff]
    %v293 = vld [vmem:[%s0 + $0x60] sm:$0xff]
    %v294 = vld [vmem:[%s0 + $0x68] sm:$0xff]
    %v295 = vld [vmem:[%s0 + $0x70] sm:$0xff]
    %v296 = vld [vmem:[%s0 + $0x78] sm:$0xff]
    %v297 = vld [vmem:[%s1] sm:$0x1]
    %298 = vset.pattern.permute.xlu0 0
    %299 = vperm.xlu0 %298, %v281
    %v300 = vpop.permute.xlu0 %299
    %301 = vset.pattern.permute.xlu0 0
    %302 = vperm.xlu0 %301, %v282
    %v303 = vpop.permute.xlu0 %302
    %304 = vset.pattern.permute.xlu0 0
    %305 = vperm.xlu0 %304, %v283
    %v306 = vpop.permute.xlu0 %305
    %307 = vset.pattern.permute.xlu0 0
    %308 = vperm.xlu0 %307, %v284
    %v309 = vpop.permute.xlu0 %308
    %310 = vset.pattern.permute.xlu0 0
    %311 = vperm.xlu0 %310, %v285
    %v312 = vpop.permute.xlu0 %311
    %313 = vset.pattern.permute.xlu0 0
    %314 = vperm.xlu0 %313, %v286
    %v315 = vpop.permute.xlu0 %314
    %316 = vset.pattern.permute.xlu0 0
    %317 = vperm.xlu0 %316, %v287
    %v318 = vpop.permute.xlu0 %317
    %319 = vset.pattern.permute.xlu0 0
    %320 = vperm.xlu0 %319, %v288
    %v321 = vpop.permute.xlu0 %320
    %322 = vset.pattern.permute.xlu0 0
    %323 = vperm.xlu0 %322, %v289
    %v324 = vpop.permute.xlu0 %323
    %325 = vset.pattern.permute.xlu0 0
    %326 = vperm.xlu0 %325, %v290
    %v327 = vpop.permute.xlu0 %326
    %328 = vset.pattern.permute.xlu0 0
    %329 = vperm.xlu0 %328, %v291
    %v330 = vpop.permute.xlu0 %329
    %331 = vset.pattern.permute.xlu0 0
    %332 = vperm.xlu0 %331, %v292
    %v333 = vpop.permute.xlu0 %332
    %334 = vset.pattern.permute.xlu0 0
    %335 = vperm.xlu0 %334, %v293
    %v336 = vpop.permute.xlu0 %335
    %337 = vset.pattern.permute.xlu0 0
    %338 = vperm.xlu0 %337, %v294
    %v339 = vpop.permute.xlu0 %338
    %340 = vset.pattern.permute.xlu0 0
    %341 = vperm.xlu0 %340, %v295
    %v342 = vpop.permute.xlu0 %341
    %343 = vset.pattern.permute.xlu0 0
    %344 = vperm.xlu0 %343, %v296
    %v345 = vpop.permute.xlu0 %344
    %v346 = vperm.slane %v297, 0
    %vm347 = vcmp.eq.s32.totalorder %v300, %v346
    %vm348 = vcmp.eq.s32.totalorder %v303, %v346
    %vm349 = vcmp.eq.s32.totalorder %v306, %v346
    %vm350 = vcmp.eq.s32.totalorder %v309, %v346
    %vm351 = vcmp.eq.s32.totalorder %v312, %v346
    %vm352 = vcmp.eq.s32.totalorder %v315, %v346
    %vm353 = vcmp.eq.s32.totalorder %v318, %v346
    %vm354 = vcmp.eq.s32.totalorder %v321, %v346
    %vm355 = vcmp.eq.s32.totalorder %v324, %v346
    %vm356 = vcmp.eq.s32.totalorder %v327, %v346
    %vm357 = vcmp.eq.s32.totalorder %v330, %v346
    %vm358 = vcmp.eq.s32.totalorder %v333, %v346
    %vm359 = vcmp.eq.s32.totalorder %v336, %v346
    %vm360 = vcmp.eq.s32.totalorder %v339, %v346
    %vm361 = vcmp.eq.s32.totalorder %v342, %v346
    %vm362 = vcmp.eq.s32.totalorder %v345, %v346
    %vm363 = vmand %vm347, %vm248
    %vm364 = vmand %vm348, %vm249
    %vm365 = vmand %vm349, %vm250
    %vm366 = vmand %vm350, %vm251
    %vm367 = vmand %vm351, %vm252
    %vm368 = vmand %vm352, %vm253
    %vm369 = vmand %vm353, %vm254
    %vm370 = vmand %vm354, %vm255
    %vm371 = vmand %vm355, %vm256
    %vm372 = vmand %vm356, %vm257
    %vm373 = vmand %vm357, %vm258
    %vm374 = vmand %vm358, %vm259
    %vm375 = vmand %vm359, %vm260
    %vm376 = vmand %vm360, %vm261
    %vm377 = vmand %vm361, %vm262
    %vm378 = vmand %vm362, %vm263
    %vm379 = vmand %vm363, %vm264
    %vm380 = vmand %vm364, %vm264
    %vm381 = vmand %vm365, %vm264
    %vm382 = vmand %vm366, %vm264
    %vm383 = vmand %vm367, %vm264
    %vm384 = vmand %vm368, %vm264
    %vm385 = vmand %vm369, %vm264
    %vm386 = vmand %vm370, %vm264
    %vm387 = vmand %vm371, %vm264
    %vm388 = vmand %vm372, %vm264
    %vm389 = vmand %vm373, %vm264
    %vm390 = vmand %vm374, %vm264
    %vm391 = vmand %vm375, %vm264
    %vm392 = vmand %vm376, %vm264
    %vm393 = vmand %vm377, %vm264
    %vm394 = vmand %vm378, %vm264
    %vm395 = vmand %vm379, %vm265
    %vm396 = vmand %vm380, %vm266
    %vm397 = vmand %vm381, %vm267
    %vm398 = vmand %vm382, %vm268
    %vm399 = vmand %vm383, %vm269
    %vm400 = vmand %vm384, %vm270
    %vm401 = vmand %vm385, %vm271
    %vm402 = vmand %vm386, %vm272
    %vm403 = vmand %vm387, %vm273
    %vm404 = vmand %vm388, %vm274
    %vm405 = vmand %vm389, %vm275
    %vm406 = vmand %vm390, %vm276
    %vm407 = vmand %vm391, %vm277
    %vm408 = vmand %vm392, %vm278
    %vm409 = vmand %vm393, %vm279
    %vm410 = vmand %vm394, %vm280
    %v411 = vsel %vm395, 1, 0
    %v412 = vsel %vm396, 1, 0
    %v413 = vsel %vm397, 1, 0
    %v414 = vsel %vm398, 1, 0
    %v415 = vsel %vm399, 1, 0
    %v416 = vsel %vm400, 1, 0
    %v417 = vsel %vm401, 1, 0
    %v418 = vsel %vm402, 1, 0
    %v419 = vsel %vm403, 1, 0
    %v420 = vsel %vm404, 1, 0
    %v421 = vsel %vm405, 1, 0
    %v422 = vsel %vm406, 1, 0
    %v423 = vsel %vm407, 1, 0
    %v424 = vsel %vm408, 1, 0
    %v425 = vsel %vm409, 1, 0
    %v426 = vsel %vm410, 1, 0
    %v427 = vcvt.s32.f32 %v411
    %v428 = vcvt.s32.f32 %v412
    %v429 = vcvt.s32.f32 %v413
    %v430 = vcvt.s32.f32 %v414
    %v431 = vcvt.s32.f32 %v415
    %v432 = vcvt.s32.f32 %v416
    %v433 = vcvt.s32.f32 %v417
    %v434 = vcvt.s32.f32 %v418
    %v435 = vcvt.s32.f32 %v419
    %v436 = vcvt.s32.f32 %v420
    %v437 = vcvt.s32.f32 %v421
    %v438 = vcvt.s32.f32 %v422
    %v439 = vcvt.s32.f32 %v423
    %v440 = vcvt.s32.f32 %v424
    %v441 = vcvt.s32.f32 %v425
    %v442 = vcvt.s32.f32 %v426
    %vm443 = vmand %vm248, %vm264
    %vm444 = vmand %vm249, %vm264
    %vm445 = vmand %vm250, %vm264
    %vm446 = vmand %vm251, %vm264
    %vm447 = vmand %vm252, %vm264
    %vm448 = vmand %vm253, %vm264
    %vm449 = vmand %vm254, %vm264
    %vm450 = vmand %vm255, %vm264
    %vm451 = vmand %vm256, %vm264
    %vm452 = vmand %vm257, %vm264
    %vm453 = vmand %vm258, %vm264
    %vm454 = vmand %vm259, %vm264
    %vm455 = vmand %vm260, %vm264
    %vm456 = vmand %vm261, %vm264
    %vm457 = vmand %vm262, %vm264
    %vm458 = vmand %vm263, %vm264
    %v459 = vsel %vm443, 1, 0
    %v460 = vsel %vm444, 1, 0
    %v461 = vsel %vm445, 1, 0
    %v462 = vsel %vm446, 1, 0
    %v463 = vsel %vm447, 1, 0
    %v464 = vsel %vm448, 1, 0
    %v465 = vsel %vm449, 1, 0
    %v466 = vsel %vm450, 1, 0
    %v467 = vsel %vm451, 1, 0
    %v468 = vsel %vm452, 1, 0
    %v469 = vsel %vm453, 1, 0
    %v470 = vsel %vm454, 1, 0
    %v471 = vsel %vm455, 1, 0
    %v472 = vsel %vm456, 1, 0
    %v473 = vsel %vm457, 1, 0
    %v474 = vsel %vm458, 1, 0
    %v475 = vcvt.s32.f32 %v459
    %v476 = vcvt.s32.f32 %v460
    %v477 = vcvt.s32.f32 %v461
    %v478 = vcvt.s32.f32 %v462
    %v479 = vcvt.s32.f32 %v463
    %v480 = vcvt.s32.f32 %v464
    %v481 = vcvt.s32.f32 %v465
    %v482 = vcvt.s32.f32 %v466
    %v483 = vcvt.s32.f32 %v467
    %v484 = vcvt.s32.f32 %v468
    %v485 = vcvt.s32.f32 %v469
    %v486 = vcvt.s32.f32 %v470
    %v487 = vcvt.s32.f32 %v471
    %v488 = vcvt.s32.f32 %v472
    %v489 = vcvt.s32.f32 %v473
    %v490 = vcvt.s32.f32 %v474
    %v491 = vsel %vm264, %v195, -1e+30
    %v492 = vsel %vm264, %v196, -1e+30
    %v493 = vsel %vm264, %v197, -1e+30
    %v494 = vsel %vm264, %v198, -1e+30
    %v495 = vsel %vm264, %v199, -1e+30
    %v496 = vsel %vm264, %v200, -1e+30
    %v497 = vsel %vm264, %v201, -1e+30
    %v498 = vsel %vm264, %v202, -1e+30
    %v499 = vsel %vm264, %v203, -1e+30
    %v500 = vsel %vm264, %v204, -1e+30
    %v501 = vsel %vm264, %v205, -1e+30
    %v502 = vsel %vm264, %v206, -1e+30
    %v503 = vsel %vm264, %v207, -1e+30
    %v504 = vsel %vm264, %v208, -1e+30
    %v505 = vsel %vm264, %v209, -1e+30
    %v506 = vsel %vm264, %v210, -1e+30
    %507 = vmax.xlane.f32.xlu0 %v491
    %v508 = vpop.xlane.xlu0 %507
    %509 = vmax.xlane.f32.xlu0 %v492
    %v510 = vpop.xlane.xlu0 %509
    %511 = vmax.xlane.f32.xlu0 %v493
    %v512 = vpop.xlane.xlu0 %511
    %513 = vmax.xlane.f32.xlu0 %v494
    %v514 = vpop.xlane.xlu0 %513
    %515 = vmax.xlane.f32.xlu0 %v495
    %v516 = vpop.xlane.xlu0 %515
    %517 = vmax.xlane.f32.xlu0 %v496
    %v518 = vpop.xlane.xlu0 %517
    %519 = vmax.xlane.f32.xlu0 %v497
    %v520 = vpop.xlane.xlu0 %519
    %521 = vmax.xlane.f32.xlu0 %v498
    %v522 = vpop.xlane.xlu0 %521
    %523 = vmax.xlane.f32.xlu0 %v499
    %v524 = vpop.xlane.xlu0 %523
    %525 = vmax.xlane.f32.xlu0 %v500
    %v526 = vpop.xlane.xlu0 %525
    %527 = vmax.xlane.f32.xlu0 %v501
    %v528 = vpop.xlane.xlu0 %527
    %529 = vmax.xlane.f32.xlu0 %v502
    %v530 = vpop.xlane.xlu0 %529
    %531 = vmax.xlane.f32.xlu0 %v503
    %v532 = vpop.xlane.xlu0 %531
    %533 = vmax.xlane.f32.xlu0 %v504
    %v534 = vpop.xlane.xlu0 %533
    %535 = vmax.xlane.f32.xlu0 %v505
    %v536 = vpop.xlane.xlu0 %535
    %537 = vmax.xlane.f32.xlu0 %v506
    %v538 = vpop.xlane.xlu0 %537
    %v539 = vsub.f32 %v195, %v508
    %v540 = vsub.f32 %v196, %v510
    %v541 = vsub.f32 %v197, %v512
    %v542 = vsub.f32 %v198, %v514
    %v543 = vsub.f32 %v199, %v516
    %v544 = vsub.f32 %v200, %v518
    %v545 = vsub.f32 %v201, %v520
    %v546 = vsub.f32 %v202, %v522
    %v547 = vsub.f32 %v203, %v524
    %v548 = vsub.f32 %v204, %v526
    %v549 = vsub.f32 %v205, %v528
    %v550 = vsub.f32 %v206, %v530
    %v551 = vsub.f32 %v207, %v532
    %v552 = vsub.f32 %v208, %v534
    %v553 = vsub.f32 %v209, %v536
    %v554 = vsub.f32 %v210, %v538
    %v555 = vmul.f32 %v539, 1.442695
    %v556 = vpow.pop %v555
    %v557 = vmul.f32 %v540, 1.442695
    %v558 = vpow.pop %v557
    %v559 = vmul.f32 %v541, 1.442695
    %v560 = vpow.pop %v559
    %v561 = vmul.f32 %v542, 1.442695
    %v562 = vpow.pop %v561
    %v563 = vmul.f32 %v543, 1.442695
    %v564 = vpow.pop %v563
    %v565 = vmul.f32 %v544, 1.442695
    %v566 = vpow.pop %v565
    %v567 = vmul.f32 %v545, 1.442695
    %v568 = vpow.pop %v567
    %v569 = vmul.f32 %v546, 1.442695
    %v570 = vpow.pop %v569
    %v571 = vmul.f32 %v547, 1.442695
    %v572 = vpow.pop %v571
    %v573 = vmul.f32 %v548, 1.442695
    %v574 = vpow.pop %v573
    %v575 = vmul.f32 %v549, 1.442695
    %v576 = vpow.pop %v575
    %v577 = vmul.f32 %v550, 1.442695
    %v578 = vpow.pop %v577
    %v579 = vmul.f32 %v551, 1.442695
    %v580 = vpow.pop %v579
    %v581 = vmul.f32 %v552, 1.442695
    %v582 = vpow.pop %v581
    %v583 = vmul.f32 %v553, 1.442695
    %v584 = vpow.pop %v583
    %v585 = vmul.f32 %v554, 1.442695
    %v586 = vpow.pop %v585
    %v587 = vmul.f32 %v556, %v475
    %v588 = vmul.f32 %v558, %v476
    %v589 = vmul.f32 %v560, %v477
    %v590 = vmul.f32 %v562, %v478
    %v591 = vmul.f32 %v564, %v479
    %v592 = vmul.f32 %v566, %v480
    %v593 = vmul.f32 %v568, %v481
    %v594 = vmul.f32 %v570, %v482
    %v595 = vmul.f32 %v572, %v483
    %v596 = vmul.f32 %v574, %v484
    %v597 = vmul.f32 %v576, %v485
    %v598 = vmul.f32 %v578, %v486
    %v599 = vmul.f32 %v580, %v487
    %v600 = vmul.f32 %v582, %v488
    %v601 = vmul.f32 %v584, %v489
    %v602 = vmul.f32 %v586, %v490
    %603 = vadd.xlane.f32.xlu0 %v587
    %v604 = vpop.xlane.xlu0 %603
    %605 = vadd.xlane.f32.xlu0 %v588
    %v606 = vpop.xlane.xlu0 %605
    %607 = vadd.xlane.f32.xlu0 %v589
    %v608 = vpop.xlane.xlu0 %607
    %609 = vadd.xlane.f32.xlu0 %v590
    %v610 = vpop.xlane.xlu0 %609
    %611 = vadd.xlane.f32.xlu0 %v591
    %v612 = vpop.xlane.xlu0 %611
    %613 = vadd.xlane.f32.xlu0 %v592
    %v614 = vpop.xlane.xlu0 %613
    %615 = vadd.xlane.f32.xlu0 %v593
    %v616 = vpop.xlane.xlu0 %615
    %617 = vadd.xlane.f32.xlu0 %v594
    %v618 = vpop.xlane.xlu0 %617
    %619 = vadd.xlane.f32.xlu0 %v595
    %v620 = vpop.xlane.xlu0 %619
    %621 = vadd.xlane.f32.xlu0 %v596
    %v622 = vpop.xlane.xlu0 %621
    %623 = vadd.xlane.f32.xlu0 %v597
    %v624 = vpop.xlane.xlu0 %623
    %625 = vadd.xlane.f32.xlu0 %v598
    %v626 = vpop.xlane.xlu0 %625
    %627 = vadd.xlane.f32.xlu0 %v599
    %v628 = vpop.xlane.xlu0 %627
    %629 = vadd.xlane.f32.xlu0 %v600
    %v630 = vpop.xlane.xlu0 %629
    %631 = vadd.xlane.f32.xlu0 %v601
    %v632 = vpop.xlane.xlu0 %631
    %633 = vadd.xlane.f32.xlu0 %v602
    %v634 = vpop.xlane.xlu0 %633
    %v635 = vlog2.pop %v604
    %v636 = vmul.f32 %v635, 0.6931472
    %v637 = vlog2.pop %v606
    %v638 = vmul.f32 %v637, 0.6931472
    %v639 = vlog2.pop %v608
    %v640 = vmul.f32 %v639, 0.6931472
    %v641 = vlog2.pop %v610
    %v642 = vmul.f32 %v641, 0.6931472
    %v643 = vlog2.pop %v612
    %v644 = vmul.f32 %v643, 0.6931472
    %v645 = vlog2.pop %v614
    %v646 = vmul.f32 %v645, 0.6931472
    %v647 = vlog2.pop %v616
    %v648 = vmul.f32 %v647, 0.6931472
    %v649 = vlog2.pop %v618
    %v650 = vmul.f32 %v649, 0.6931472
    %v651 = vlog2.pop %v620
    %v652 = vmul.f32 %v651, 0.6931472
    %v653 = vlog2.pop %v622
    %v654 = vmul.f32 %v653, 0.6931472
    %v655 = vlog2.pop %v624
    %v656 = vmul.f32 %v655, 0.6931472
    %v657 = vlog2.pop %v626
    %v658 = vmul.f32 %v657, 0.6931472
    %v659 = vlog2.pop %v628
    %v660 = vmul.f32 %v659, 0.6931472
    %v661 = vlog2.pop %v630
    %v662 = vmul.f32 %v661, 0.6931472
    %v663 = vlog2.pop %v632
    %v664 = vmul.f32 %v663, 0.6931472
    %v665 = vlog2.pop %v634
    %v666 = vmul.f32 %v665, 0.6931472
    %v667 = vsub.f32 %v539, %v636
    %v668 = vsub.f32 %v540, %v638
    %v669 = vsub.f32 %v541, %v640
    %v670 = vsub.f32 %v542, %v642
    %v671 = vsub.f32 %v543, %v644
    %v672 = vsub.f32 %v544, %v646
    %v673 = vsub.f32 %v545, %v648
    %v674 = vsub.f32 %v546, %v650
    %v675 = vsub.f32 %v547, %v652
    %v676 = vsub.f32 %v548, %v654
    %v677 = vsub.f32 %v549, %v656
    %v678 = vsub.f32 %v550, %v658
    %v679 = vsub.f32 %v551, %v660
    %v680 = vsub.f32 %v552, %v662
    %v681 = vsub.f32 %v553, %v664
    %v682 = vsub.f32 %v554, %v666
    %v683 = vmul.f32 %v427, %v667
    %v684 = vmul.f32 %v428, %v668
    %v685 = vmul.f32 %v429, %v669
    %v686 = vmul.f32 %v430, %v670
    %v687 = vmul.f32 %v431, %v671
    %v688 = vmul.f32 %v432, %v672
    %v689 = vmul.f32 %v433, %v673
    %v690 = vmul.f32 %v434, %v674
    %v691 = vmul.f32 %v435, %v675
    %v692 = vmul.f32 %v436, %v676
    %v693 = vmul.f32 %v437, %v677
    %v694 = vmul.f32 %v438, %v678
    %v695 = vmul.f32 %v439, %v679
    %v696 = vmul.f32 %v440, %v680
    %v697 = vmul.f32 %v441, %v681
    %v698 = vmul.f32 %v442, %v682
    %699 = vadd.xlane.f32.xlu0 %v683
    %v700 = vpop.xlane.xlu0 %699
    %701 = vadd.xlane.f32.xlu0 %v684
    %v702 = vpop.xlane.xlu0 %701
    %703 = vadd.xlane.f32.xlu0 %v685
    %v704 = vpop.xlane.xlu0 %703
    %705 = vadd.xlane.f32.xlu0 %v686
    %v706 = vpop.xlane.xlu0 %705
    %707 = vadd.xlane.f32.xlu0 %v687
    %v708 = vpop.xlane.xlu0 %707
    %709 = vadd.xlane.f32.xlu0 %v688
    %v710 = vpop.xlane.xlu0 %709
    %711 = vadd.xlane.f32.xlu0 %v689
    %v712 = vpop.xlane.xlu0 %711
    %713 = vadd.xlane.f32.xlu0 %v690
    %v714 = vpop.xlane.xlu0 %713
    %715 = vadd.xlane.f32.xlu0 %v691
    %v716 = vpop.xlane.xlu0 %715
    %717 = vadd.xlane.f32.xlu0 %v692
    %v718 = vpop.xlane.xlu0 %717
    %719 = vadd.xlane.f32.xlu0 %v693
    %v720 = vpop.xlane.xlu0 %719
    %721 = vadd.xlane.f32.xlu0 %v694
    %v722 = vpop.xlane.xlu0 %721
    %723 = vadd.xlane.f32.xlu0 %v695
    %v724 = vpop.xlane.xlu0 %723
    %725 = vadd.xlane.f32.xlu0 %v696
    %v726 = vpop.xlane.xlu0 %725
    %727 = vadd.xlane.f32.xlu0 %v697
    %v728 = vpop.xlane.xlu0 %727
    %729 = vadd.xlane.f32.xlu0 %v698
    %v730 = vpop.xlane.xlu0 %729
    %731 = vadd.xlane.f32.xlu0 %v427
    %v732 = vpop.xlane.xlu0 %731
    %733 = vadd.xlane.f32.xlu0 %v428
    %v734 = vpop.xlane.xlu0 %733
    %735 = vadd.xlane.f32.xlu0 %v429
    %v736 = vpop.xlane.xlu0 %735
    %737 = vadd.xlane.f32.xlu0 %v430
    %v738 = vpop.xlane.xlu0 %737
    %739 = vadd.xlane.f32.xlu0 %v431
    %v740 = vpop.xlane.xlu0 %739
    %741 = vadd.xlane.f32.xlu0 %v432
    %v742 = vpop.xlane.xlu0 %741
    %743 = vadd.xlane.f32.xlu0 %v433
    %v744 = vpop.xlane.xlu0 %743
    %745 = vadd.xlane.f32.xlu0 %v434
    %v746 = vpop.xlane.xlu0 %745
    %747 = vadd.xlane.f32.xlu0 %v435
    %v748 = vpop.xlane.xlu0 %747
    %749 = vadd.xlane.f32.xlu0 %v436
    %v750 = vpop.xlane.xlu0 %749
    %751 = vadd.xlane.f32.xlu0 %v437
    %v752 = vpop.xlane.xlu0 %751
    %753 = vadd.xlane.f32.xlu0 %v438
    %v754 = vpop.xlane.xlu0 %753
    %755 = vadd.xlane.f32.xlu0 %v439
    %v756 = vpop.xlane.xlu0 %755
    %757 = vadd.xlane.f32.xlu0 %v440
    %v758 = vpop.xlane.xlu0 %757
    %759 = vadd.xlane.f32.xlu0 %v441
    %v760 = vpop.xlane.xlu0 %759
    %761 = vadd.xlane.f32.xlu0 %v442
    %v762 = vpop.xlane.xlu0 %761
    %vm763 = vcmp.gt.f32.partialorder %v732, 0.0
    %vm764 = vcmp.gt.f32.partialorder %v734, 0.0
    %vm765 = vcmp.gt.f32.partialorder %v736, 0.0
    %vm766 = vcmp.gt.f32.partialorder %v738, 0.0
    %vm767 = vcmp.gt.f32.partialorder %v740, 0.0
    %vm768 = vcmp.gt.f32.partialorder %v742, 0.0
    %vm769 = vcmp.gt.f32.partialorder %v744, 0.0
    %vm770 = vcmp.gt.f32.partialorder %v746, 0.0
    %vm771 = vcmp.gt.f32.partialorder %v748, 0.0
    %vm772 = vcmp.gt.f32.partialorder %v750, 0.0
    %vm773 = vcmp.gt.f32.partialorder %v752, 0.0
    %vm774 = vcmp.gt.f32.partialorder %v754, 0.0
    %vm775 = vcmp.gt.f32.partialorder %v756, 0.0
    %vm776 = vcmp.gt.f32.partialorder %v758, 0.0
    %vm777 = vcmp.gt.f32.partialorder %v760, 0.0
    %vm778 = vcmp.gt.f32.partialorder %v762, 0.0
    %v779 = vmax.f32 %v732, 1.0
    %v780 = vmax.f32 %v734, 1.0
    %v781 = vmax.f32 %v736, 1.0
    %v782 = vmax.f32 %v738, 1.0
    %v783 = vmax.f32 %v740, 1.0
    %v784 = vmax.f32 %v742, 1.0
    %v785 = vmax.f32 %v744, 1.0
    %v786 = vmax.f32 %v746, 1.0
    %v787 = vmax.f32 %v748, 1.0
    %v788 = vmax.f32 %v750, 1.0
    %v789 = vmax.f32 %v752, 1.0
    %v790 = vmax.f32 %v754, 1.0
    %v791 = vmax.f32 %v756, 1.0
    %v792 = vmax.f32 %v758, 1.0
    %v793 = vmax.f32 %v760, 1.0
    %v794 = vmax.f32 %v762, 1.0
    %v795 = vrcp.pop %v779
    %v796 = vmul.f32 %v779, %v795
    %v797 = vsub.f32 1.0, %v796
    %v798 = vmul.f32 %v795, %v797
    %v799 = vadd.f32 %v795, %v798
    %vm800 = vweird.f32 %v779
    %vm801 = vweird.f32 %v795
    %vm802 = vmor %vm800, %vm801
    %v803 = vsel %vm802, %v795, %v799
    %v804 = vand.u32 2147483647, %v779
    %vm805 = vcmp.eq.f32.partialorder %v804, 8.507059e+37
    %v806 = vand.u32 %v779, 2147483648
    %v807 = vor.u32 1.1754944e-38, %v806
    %v808 = vsel %vm805, %v807, %v803
    %v809 = vmul.f32 %v700, %v808
    %v810 = vrcp.pop %v780
    %v811 = vmul.f32 %v780, %v810
    %v812 = vsub.f32 1.0, %v811
    %v813 = vmul.f32 %v810, %v812
    %v814 = vadd.f32 %v810, %v813
    %vm815 = vweird.f32 %v780
    %vm816 = vweird.f32 %v810
    %vm817 = vmor %vm815, %vm816
    %v818 = vsel %vm817, %v810, %v814
    %v819 = vand.u32 2147483647, %v780
    %vm820 = vcmp.eq.f32.partialorder %v819, 8.507059e+37
    %v821 = vand.u32 %v780, 2147483648
    %v822 = vor.u32 1.1754944e-38, %v821
    %v823 = vsel %vm820, %v822, %v818
    %v824 = vmul.f32 %v702, %v823
    %v825 = vrcp.pop %v781
    %v826 = vmul.f32 %v781, %v825
    %v827 = vsub.f32 1.0, %v826
    %v828 = vmul.f32 %v825, %v827
    %v829 = vadd.f32 %v825, %v828
    %vm830 = vweird.f32 %v781
    %vm831 = vweird.f32 %v825
    %vm832 = vmor %vm830, %vm831
    %v833 = vsel %vm832, %v825, %v829
    %v834 = vand.u32 2147483647, %v781
    %vm835 = vcmp.eq.f32.partialorder %v834, 8.507059e+37
    %v836 = vand.u32 %v781, 2147483648
    %v837 = vor.u32 1.1754944e-38, %v836
    %v838 = vsel %vm835, %v837, %v833
    %v839 = vmul.f32 %v704, %v838
    %v840 = vrcp.pop %v782
    %v841 = vmul.f32 %v782, %v840
    %v842 = vsub.f32 1.0, %v841
    %v843 = vmul.f32 %v840, %v842
    %v844 = vadd.f32 %v840, %v843
    %vm845 = vweird.f32 %v782
    %vm846 = vweird.f32 %v840
    %vm847 = vmor %vm845, %vm846
    %v848 = vsel %vm847, %v840, %v844
    %v849 = vand.u32 2147483647, %v782
    %vm850 = vcmp.eq.f32.partialorder %v849, 8.507059e+37
    %v851 = vand.u32 %v782, 2147483648
    %v852 = vor.u32 1.1754944e-38, %v851
    %v853 = vsel %vm850, %v852, %v848
    %v854 = vmul.f32 %v706, %v853
    %v855 = vrcp.pop %v783
    %v856 = vmul.f32 %v783, %v855
    %v857 = vsub.f32 1.0, %v856
    %v858 = vmul.f32 %v855, %v857
    %v859 = vadd.f32 %v855, %v858
    %vm860 = vweird.f32 %v783
    %vm861 = vweird.f32 %v855
    %vm862 = vmor %vm860, %vm861
    %v863 = vsel %vm862, %v855, %v859
    %v864 = vand.u32 2147483647, %v783
    %vm865 = vcmp.eq.f32.partialorder %v864, 8.507059e+37
    %v866 = vand.u32 %v783, 2147483648
    %v867 = vor.u32 1.1754944e-38, %v866
    %v868 = vsel %vm865, %v867, %v863
    %v869 = vmul.f32 %v708, %v868
    %v870 = vrcp.pop %v784
    %v871 = vmul.f32 %v784, %v870
    %v872 = vsub.f32 1.0, %v871
    %v873 = vmul.f32 %v870, %v872
    %v874 = vadd.f32 %v870, %v873
    %vm875 = vweird.f32 %v784
    %vm876 = vweird.f32 %v870
    %vm877 = vmor %vm875, %vm876
    %v878 = vsel %vm877, %v870, %v874
    %v879 = vand.u32 2147483647, %v784
    %vm880 = vcmp.eq.f32.partialorder %v879, 8.507059e+37
    %v881 = vand.u32 %v784, 2147483648
    %v882 = vor.u32 1.1754944e-38, %v881
    %v883 = vsel %vm880, %v882, %v878
    %v884 = vmul.f32 %v710, %v883
    %v885 = vrcp.pop %v785
    %v886 = vmul.f32 %v785, %v885
    %v887 = vsub.f32 1.0, %v886
    %v888 = vmul.f32 %v885, %v887
    %v889 = vadd.f32 %v885, %v888
    %vm890 = vweird.f32 %v785
    %vm891 = vweird.f32 %v885
    %vm892 = vmor %vm890, %vm891
    %v893 = vsel %vm892, %v885, %v889
    %v894 = vand.u32 2147483647, %v785
    %vm895 = vcmp.eq.f32.partialorder %v894, 8.507059e+37
    %v896 = vand.u32 %v785, 2147483648
    %v897 = vor.u32 1.1754944e-38, %v896
    %v898 = vsel %vm895, %v897, %v893
    %v899 = vmul.f32 %v712, %v898
    %v900 = vrcp.pop %v786
    %v901 = vmul.f32 %v786, %v900
    %v902 = vsub.f32 1.0, %v901
    %v903 = vmul.f32 %v900, %v902
    %v904 = vadd.f32 %v900, %v903
    %vm905 = vweird.f32 %v786
    %vm906 = vweird.f32 %v900
    %vm907 = vmor %vm905, %vm906
    %v908 = vsel %vm907, %v900, %v904
    %v909 = vand.u32 2147483647, %v786
    %vm910 = vcmp.eq.f32.partialorder %v909, 8.507059e+37
    %v911 = vand.u32 %v786, 2147483648
    %v912 = vor.u32 1.1754944e-38, %v911
    %v913 = vsel %vm910, %v912, %v908
    %v914 = vmul.f32 %v714, %v913
    %v915 = vrcp.pop %v787
    %v916 = vmul.f32 %v787, %v915
    %v917 = vsub.f32 1.0, %v916
    %v918 = vmul.f32 %v915, %v917
    %v919 = vadd.f32 %v915, %v918
    %vm920 = vweird.f32 %v787
    %vm921 = vweird.f32 %v915
    %vm922 = vmor %vm920, %vm921
    %v923 = vsel %vm922, %v915, %v919
    %v924 = vand.u32 2147483647, %v787
    %vm925 = vcmp.eq.f32.partialorder %v924, 8.507059e+37
    %v926 = vand.u32 %v787, 2147483648
    %v927 = vor.u32 1.1754944e-38, %v926
    %v928 = vsel %vm925, %v927, %v923
    %v929 = vmul.f32 %v716, %v928
    %v930 = vrcp.pop %v788
    %v931 = vmul.f32 %v788, %v930
    %v932 = vsub.f32 1.0, %v931
    %v933 = vmul.f32 %v930, %v932
    %v934 = vadd.f32 %v930, %v933
    %vm935 = vweird.f32 %v788
    %vm936 = vweird.f32 %v930
    %vm937 = vmor %vm935, %vm936
    %v938 = vsel %vm937, %v930, %v934
    %v939 = vand.u32 2147483647, %v788
    %vm940 = vcmp.eq.f32.partialorder %v939, 8.507059e+37
    %v941 = vand.u32 %v788, 2147483648
    %v942 = vor.u32 1.1754944e-38, %v941
    %v943 = vsel %vm940, %v942, %v938
    %v944 = vmul.f32 %v718, %v943
    %v945 = vrcp.pop %v789
    %v946 = vmul.f32 %v789, %v945
    %v947 = vsub.f32 1.0, %v946
    %v948 = vmul.f32 %v945, %v947
    %v949 = vadd.f32 %v945, %v948
    %vm950 = vweird.f32 %v789
    %vm951 = vweird.f32 %v945
    %vm952 = vmor %vm950, %vm951
    %v953 = vsel %vm952, %v945, %v949
    %v954 = vand.u32 2147483647, %v789
    %vm955 = vcmp.eq.f32.partialorder %v954, 8.507059e+37
    %v956 = vand.u32 %v789, 2147483648
    %v957 = vor.u32 1.1754944e-38, %v956
    %v958 = vsel %vm955, %v957, %v953
    %v959 = vmul.f32 %v720, %v958
    %v960 = vrcp.pop %v790
    %v961 = vmul.f32 %v790, %v960
    %v962 = vsub.f32 1.0, %v961
    %v963 = vmul.f32 %v960, %v962
    %v964 = vadd.f32 %v960, %v963
    %vm965 = vweird.f32 %v790
    %vm966 = vweird.f32 %v960
    %vm967 = vmor %vm965, %vm966
    %v968 = vsel %vm967, %v960, %v964
    %v969 = vand.u32 2147483647, %v790
    %vm970 = vcmp.eq.f32.partialorder %v969, 8.507059e+37
    %v971 = vand.u32 %v790, 2147483648
    %v972 = vor.u32 1.1754944e-38, %v971
    %v973 = vsel %vm970, %v972, %v968
    %v974 = vmul.f32 %v722, %v973
    %v975 = vrcp.pop %v791
    %v976 = vmul.f32 %v791, %v975
    %v977 = vsub.f32 1.0, %v976
    %v978 = vmul.f32 %v975, %v977
    %v979 = vadd.f32 %v975, %v978
    %vm980 = vweird.f32 %v791
    %vm981 = vweird.f32 %v975
    %vm982 = vmor %vm980, %vm981
    %v983 = vsel %vm982, %v975, %v979
    %v984 = vand.u32 2147483647, %v791
    %vm985 = vcmp.eq.f32.partialorder %v984, 8.507059e+37
    %v986 = vand.u32 %v791, 2147483648
    %v987 = vor.u32 1.1754944e-38, %v986
    %v988 = vsel %vm985, %v987, %v983
    %v989 = vmul.f32 %v724, %v988
    %v990 = vrcp.pop %v792
    %v991 = vmul.f32 %v792, %v990
    %v992 = vsub.f32 1.0, %v991
    %v993 = vmul.f32 %v990, %v992
    %v994 = vadd.f32 %v990, %v993
    %vm995 = vweird.f32 %v792
    %vm996 = vweird.f32 %v990
    %vm997 = vmor %vm995, %vm996
    %v998 = vsel %vm997, %v990, %v994
    %v999 = vand.u32 2147483647, %v792
    %vm1000 = vcmp.eq.f32.partialorder %v999, 8.507059e+37
    %v1001 = vand.u32 %v792, 2147483648
    %v1002 = vor.u32 1.1754944e-38, %v1001
    %v1003 = vsel %vm1000, %v1002, %v998
    %v1004 = vmul.f32 %v726, %v1003
    %v1005 = vrcp.pop %v793
    %v1006 = vmul.f32 %v793, %v1005
    %v1007 = vsub.f32 1.0, %v1006
    %v1008 = vmul.f32 %v1005, %v1007
    %v1009 = vadd.f32 %v1005, %v1008
    %vm1010 = vweird.f32 %v793
    %vm1011 = vweird.f32 %v1005
    %vm1012 = vmor %vm1010, %vm1011
    %v1013 = vsel %vm1012, %v1005, %v1009
    %v1014 = vand.u32 2147483647, %v793
    %vm1015 = vcmp.eq.f32.partialorder %v1014, 8.507059e+37
    %v1016 = vand.u32 %v793, 2147483648
    %v1017 = vor.u32 1.1754944e-38, %v1016
    %v1018 = vsel %vm1015, %v1017, %v1013
    %v1019 = vmul.f32 %v728, %v1018
    %v1020 = vrcp.pop %v794
    %v1021 = vmul.f32 %v794, %v1020
    %v1022 = vsub.f32 1.0, %v1021
    %v1023 = vmul.f32 %v1020, %v1022
    %v1024 = vadd.f32 %v1020, %v1023
    %vm1025 = vweird.f32 %v794
    %vm1026 = vweird.f32 %v1020
    %vm1027 = vmor %vm1025, %vm1026
    %v1028 = vsel %vm1027, %v1020, %v1024
    %v1029 = vand.u32 2147483647, %v794
    %vm1030 = vcmp.eq.f32.partialorder %v1029, 8.507059e+37
    %v1031 = vand.u32 %v794, 2147483648
    %v1032 = vor.u32 1.1754944e-38, %v1031
    %v1033 = vsel %vm1030, %v1032, %v1028
    %v1034 = vmul.f32 %v730, %v1033
    %v1035 = vsel %vm763, %v809, 0.0
    %v1036 = vsel %vm764, %v824, 0.0
    %v1037 = vsel %vm765, %v839, 0.0
    %v1038 = vsel %vm766, %v854, 0.0
    %v1039 = vsel %vm767, %v869, 0.0
    %v1040 = vsel %vm768, %v884, 0.0
    %v1041 = vsel %vm769, %v899, 0.0
    %v1042 = vsel %vm770, %v914, 0.0
    %v1043 = vsel %vm771, %v929, 0.0
    %v1044 = vsel %vm772, %v944, 0.0
    %v1045 = vsel %vm773, %v959, 0.0
    %v1046 = vsel %vm774, %v974, 0.0
    %v1047 = vsel %vm775, %v989, 0.0
    %v1048 = vsel %vm776, %v1004, 0.0
    %v1049 = vsel %vm777, %v1019, 0.0
    %v1050 = vsel %vm778, %v1034, 0.0
    %v1051 = vmul.f32 %v1035, -1.0
    %v1052 = vmul.f32 %v1036, -1.0
    %v1053 = vmul.f32 %v1037, -1.0
    %v1054 = vmul.f32 %v1038, -1.0
    %v1055 = vmul.f32 %v1039, -1.0
    %v1056 = vmul.f32 %v1040, -1.0
    %v1057 = vmul.f32 %v1041, -1.0
    %v1058 = vmul.f32 %v1042, -1.0
    %v1059 = vmul.f32 %v1043, -1.0
    %v1060 = vmul.f32 %v1044, -1.0
    %v1061 = vmul.f32 %v1045, -1.0
    %v1062 = vmul.f32 %v1046, -1.0
    %v1063 = vmul.f32 %v1047, -1.0
    %v1064 = vmul.f32 %v1048, -1.0
    %v1065 = vmul.f32 %v1049, -1.0
    %v1066 = vmul.f32 %v1050, -1.0
    %vm1067 = vcmask 7168
    %v1068 = vsel %vm1067, %v1051, 0.0
    %v1069 = vsel %vm1067, %v1052, 0.0
    %v1070 = vadd.f32 %v1068, %v1069
    %v1071 = vsel %vm1067, %v1053, 0.0
    %v1072 = vadd.f32 %v1070, %v1071
    %v1073 = vsel %vm1067, %v1054, 0.0
    %v1074 = vadd.f32 %v1072, %v1073
    %v1075 = vsel %vm1067, %v1055, 0.0
    %v1076 = vadd.f32 %v1074, %v1075
    %v1077 = vsel %vm1067, %v1056, 0.0
    %v1078 = vadd.f32 %v1076, %v1077
    %v1079 = vsel %vm1067, %v1057, 0.0
    %v1080 = vadd.f32 %v1078, %v1079
    %v1081 = vsel %vm1067, %v1058, 0.0
    %v1082 = vadd.f32 %v1080, %v1081
    %v1083 = vsel %vm1067, %v1059, 0.0
    %v1084 = vadd.f32 %v1082, %v1083
    %v1085 = vsel %vm1067, %v1060, 0.0
    %v1086 = vadd.f32 %v1084, %v1085
    %v1087 = vsel %vm1067, %v1061, 0.0
    %v1088 = vadd.f32 %v1086, %v1087
    %v1089 = vsel %vm1067, %v1062, 0.0
    %v1090 = vadd.f32 %v1088, %v1089
    %v1091 = vsel %vm1067, %v1063, 0.0
    %v1092 = vadd.f32 %v1090, %v1091
    %v1093 = vsel %vm1067, %v1064, 0.0
    %v1094 = vadd.f32 %v1092, %v1093
    %v1095 = vsel %vm1067, %v1065, 0.0
    %v1096 = vadd.f32 %v1094, %v1095
    %v1097 = vsel %vm1067, %v1066, 0.0
    %v1098 = vadd.f32 %v1096, %v1097
    %1099 = vadd.xlane.f32.xlu0 %v1098
    %v1100 = vpop.xlane.xlu0 %1099
    %v1101 = vrot.slane %v1100, 4
    %v1102 = vadd.f32 %v1100, %v1101
    %v1103 = vrot.slane %v1102, 2
    %v1104 = vadd.f32 %v1102, %v1103
    %v1105 = vrot.slane %v1104, 1
    %v1106 = vadd.f32 %v1104, %v1105
    %s1107 = vtos %v1106
    %v1108 = vstv %s1107
    %1109 = vst [vmem:[#allocation2] sm:$0xff] %v1108
    // Predicated region
    $region18: #{tpu_custom_call.1} parent=1 // pred_check
      _
    $region19: #{tpu_custom_call.1} parent=1 // pred_check_branch
      %1111 = sbr.rel (0) target = $region21
    $region20: #{tpu_custom_call.1} parent=1 // pred_region
      %1113 = vsyncadd [#allocation3], 0
      %s1115 = sshll.u32 [#allocation2], 4
      %s1116 = int_to_ptr.vmem [resolvable:$true] %s1115
      %s1117 = sshll.u32 %s4, 4
      %s1118 = int_to_ptr.hbm [resolvable:$true] %s1117
      %1120 = dma.vmem_to_hbm [thread:$0]  %s1116, 128, %s1118, [#allocation3]
    $region21: #{tpu_custom_call.1} parent=1 // pred_fallthru
      _
    // Predicated region
    $region22: #{tpu_custom_call.1} parent=1 // pred_check
      _
    $region23: #{tpu_custom_call.1} parent=1 // pred_check_branch
      %1122 = sbr.rel (0) target = $region25
    $region24: #{tpu_custom_call.1} parent=1 // pred_region
      %1124 = dma.done [#allocation3], 128
    $region25: #{tpu_custom_call.1} parent=1 // pred_fallthru
      _
    %1125 = vsyncpa [#allocation3], 1

</llo_original>
